<compile_context>
chip_gen: v7x
topology: tpu7x:2x2x1
jax: 0.10.0
libtpu: 0.0.40
codegen_flags: <defaults>
</compile_context>

<pallas_src>
import functools

import jax
import jax.numpy as jnp
from jax.experimental import pallas as pl
from jax.experimental.pallas import tpu as pltpu


def _dice_kernel(p_ref, t_ref, o_pt_ref, o_sum_ref, acc_ref, *,
                 n_valid, block_rows, lanes, steps_per_slab):
    c = pl.program_id(0)          # parallel slab
    k = pl.program_id(1)          # reduction step within the slab

    @pl.when(k == 0)
    def _init():
        acc_ref[...] = jnp.zeros_like(acc_ref)

    # Global tile index / flat-element offset of this grid step.  Duplicate
    # steps (when num_slabs * steps_per_slab > total_tiles) get row0 >= rows,
    # so the mask below zeroes their contribution.
    tile_idx = c * steps_per_slab + k
    row0 = tile_idx * block_rows

    p = jax.nn.sigmoid(p_ref[...].astype(jnp.float32))
    t = t_ref[...].astype(jnp.float32)

    tile_fully_valid = (row0 + block_rows) * lanes <= n_valid

    @pl.when(tile_fully_valid)
    def _full_tile():
        acc_ref[0] += p * t
        acc_ref[1] += p + t          # sum(p) + sum(t) == sum(p + t)

    @pl.when(jnp.logical_not(tile_fully_valid))
    def _ragged_tile():
        # Mask out tail elements (flat index >= n_valid).  Also covers data
        # Pallas fills past the array edge and fully-duplicated tiles.
        row_i = jax.lax.broadcasted_iota(jnp.int32, (block_rows, lanes), 0)
        lane_i = jax.lax.broadcasted_iota(jnp.int32, (block_rows, lanes), 1)
        elem = (row0 + row_i) * lanes + lane_i
        mask = elem < n_valid
        acc_ref[0] += jnp.where(mask, p * t, 0.0)
        acc_ref[1] += jnp.where(mask, p + t, 0.0)

    @pl.when(k == pl.num_programs(1) - 1)
    def _finalize():
        s_pt = jnp.sum(acc_ref[0], axis=(0, 1), keepdims=True)    # (1, 1)
        s_sum = jnp.sum(acc_ref[1], axis=(0, 1), keepdims=True)   # (1, 1)
        # Broadcast the per-slab partials into a full (8, 128) tile so the
        # store is an unmasked full-tile vst; the wrapper reads [c, 0, 0].
        o_pt_ref[0] = jnp.broadcast_to(s_pt, (8, 128))
        o_sum_ref[0] = jnp.broadcast_to(s_sum, (8, 128))


def binary_dice_loss(predictive, target, *, smooth=1e-06, p=2,
                     reduction='mean', loss_weight=1.0,
                     block_rows=None, num_slabs=2):
    """Pallas implementation of BinaryDiceLoss.forward. Returns an f32 scalar.

    NOTE: the exponent `p` is accepted but unused, exactly like the reference
    forward (which hardcodes sum(x) + sum(y) in the denominator), and
    reduction 'mean'/'sum' are identities on the scalar loss.
    """
    assert predictive.shape[0] == target.shape[0], \
        "predict & target batch size don't match"
    if reduction not in ('mean', 'sum'):
        raise Exception('Unexpected reduction {}'.format(reduction))

    pred_flat = predictive.reshape(-1)     # free; keep caller dtype
    targ_flat = target.reshape(-1)
    n = pred_flat.shape[0]

    # Lane-dense 2-D view; prefer wider rows (longer contiguous DMA rows).
    # Reshape is free when n divides; otherwise only a minimal (< lanes
    # elements) zero pad is applied and excluded by the in-kernel mask.
    lanes = next((L for L in (512, 256, 128) if n % L == 0), 128)
    rows = pl.cdiv(n, lanes)
    if rows * lanes != n:
        pad = rows * lanes - n
        pred_flat = jnp.pad(pred_flat, (0, pad))
        targ_flat = jnp.pad(targ_flat, (0, pad))
    pred2d = pred_flat.reshape(rows, lanes)
    targ2d = targ_flat.reshape(rows, lanes)

    # ~1 MiB (f32-equivalent) per input tile: big enough to amortise per-step
    # overhead, small enough that 2 inputs x 2 pipeline buffers + 2 f32
    # accumulator tiles fit the default scoped-VMEM budget on v5e/v6e/v7x.
    if block_rows is None:
        target_rows = max(8, (1 << 20) // (4 * lanes))
        block_rows = rows if rows <= target_rows else (target_rows // 32) * 32

    total_tiles = pl.cdiv(rows, block_rows)
    num_slabs = max(1, min(num_slabs, total_tiles))
    steps_per_slab = pl.cdiv(total_tiles, num_slabs)

    # Clamp so duplicate steps (num_slabs * steps_per_slab > total_tiles)
    # re-read a valid tile; their contribution is masked to zero in-kernel.
    def tile_map(c, k):
        return (jnp.minimum(c * steps_per_slab + k, total_tiles - 1), 0)

    kernel = functools.partial(_dice_kernel,
                               n_valid=n,
                               block_rows=block_rows,
                               lanes=lanes,
                               steps_per_slab=steps_per_slab)

    out_pt, out_sum = pl.pallas_call(
        kernel,
        out_shape=[jax.ShapeDtypeStruct((num_slabs, 8, 128), jnp.float32),
                   jax.ShapeDtypeStruct((num_slabs, 8, 128), jnp.float32)],
        grid_spec=pltpu.PrefetchScalarGridSpec(
            num_scalar_prefetch=0,
            grid=(num_slabs, steps_per_slab),
            in_specs=[pl.BlockSpec((block_rows, lanes), tile_map),
                      pl.BlockSpec((block_rows, lanes), tile_map)],
            out_specs=[pl.BlockSpec((1, 8, 128), lambda c, k: (c, 0, 0)),
                       pl.BlockSpec((1, 8, 128), lambda c, k: (c, 0, 0))],
            scratch_shapes=[pltpu.VMEM((2, block_rows, lanes), jnp.float32)],
        ),
        compiler_params=pltpu.CompilerParams(
            dimension_semantics=("parallel", "arbitrary")),
    )(pred2d, targ2d)

    # Trivial per-slab combine (num_slabs scalars each).
    s_pt = jnp.sum(out_pt[:, 0, 0])
    s_sum = jnp.sum(out_sum[:, 0, 0])
    num = 2.0 * s_pt + smooth
    den = s_sum + smooth
    # 'mean' / 'sum' over a scalar are identities (matches the torch module).
    return (loss_weight * (1.0 - num / den)).astype(jnp.float32)


def _reference(predictive, target, smooth=1e-06, loss_weight=1.0):
    pr = jax.nn.sigmoid(predictive.astype(jnp.float32)).reshape(-1)
    t = target.astype(jnp.float32).reshape(-1)
    num = 2.0 * jnp.sum(pr * t) + smooth
    den = jnp.sum(pr) + jnp.sum(t) + smooth
    return loss_weight * (1.0 - num / den)


if __name__ == "__main__":
    key = jax.random.PRNGKey(0)
    k1, k2, k3, k4 = jax.random.split(key, 4)

    # Primary case: binary segmentation logits/labels, [N, C, H, W].
    x_shape = (2, 4, 16, 16)
    predictive = jax.random.normal(k1, x_shape, dtype=jnp.float32)
    target = (jax.random.uniform(k2, x_shape) > 0.5).astype(jnp.float32)

    loss = binary_dice_loss(predictive, target, smooth=1e-06, p=2,
                            reduction='mean', loss_weight=1.0)
    loss = jax.block_until_ready(loss)
    ref = _reference(predictive, target)
    assert jnp.allclose(loss, ref, atol=1e-5, rtol=1e-5), (loss, ref)

    # Ragged case (n not a multiple of 128): exercises the in-kernel tail mask.
    y_shape = (2, 3, 17, 19)
    pred2 = jax.random.normal(k3, y_shape, dtype=jnp.float32)
    targ2 = (jax.random.uniform(k4, y_shape) > 0.5).astype(jnp.float32)
    loss2 = jax.block_until_ready(binary_dice_loss(pred2, targ2))
    ref2 = _reference(pred2, targ2)
    assert jnp.allclose(loss2, ref2, atol=1e-5, rtol=1e-5), (loss2, ref2)

    # Multi-tile + 2 parallel slabs (with one masked duplicate step):
    # exercises the megacore-style split used on v7x.
    z_shape = (2, 4, 40, 64)   # 20480 elements -> 5 tiles of (8, 512)
    pred3 = jax.random.normal(k1, z_shape, dtype=jnp.float32)
    targ3 = (jax.random.uniform(k2, z_shape) > 0.5).astype(jnp.float32)
    loss3 = jax.block_until_ready(
        binary_dice_loss(pred3, targ3, block_rows=8, num_slabs=2))
    ref3 = _reference(pred3, targ3)
    assert jnp.allclose(loss3, ref3, atol=1e-5, rtol=1e-5), (loss3, ref3)

    print("KERNEL_OK")
</pallas_src>

<mosaic_0001>
module attributes {stable_mosaic.version = 11 : i64} {
  func.func @_dice_kernel(%arg0: i32, %arg1: i32, %arg2: memref<4x512xf32, #tpu.memory_space<vmem>>, %arg3: memref<4x512xf32, #tpu.memory_space<vmem>>, %arg4: memref<1x8x128xf32, #tpu.memory_space<vmem>>, %arg5: memref<1x8x128xf32, #tpu.memory_space<vmem>>, %arg6: memref<2x4x512xf32, #tpu.memory_space<vmem>>) attributes {dimension_semantics = [#tpu.dimension_semantics<parallel>, #tpu.dimension_semantics<arbitrary>], iteration_bounds = array<i64: 1, 1>, scalar_prefetch = 0 : i64, scratch_operands = 1 : i64, tpu.core_type = #tpu.core_type<tc>, window_params = [{transform_indices = @transform_0, window_bounds = array<i64: 4, 512>}, {transform_indices = @transform_1, window_bounds = array<i64: 4, 512>}, {transform_indices = @transform_2, window_bounds = array<i64: 1, 8, 128>}, {transform_indices = @transform_3, window_bounds = array<i64: 1, 8, 128>}]} {
    %c0_i32 = arith.constant 0 : i32
    %0 = arith.cmpi eq, %arg1, %c0_i32 : i32
    %1 = arith.extui %0 : i1 to i32
    %c0_i32_0 = arith.constant 0 : i32
    %2 = arith.cmpi ne, %1, %c0_i32_0 : i32
    scf.if %2 {
      %cst_9 = arith.constant 0.000000e+00 : f32
      %24 = vector.broadcast %cst_9 : f32 to vector<2x4x512xf32>
      %c0_10 = arith.constant 0 : index
      %c0_11 = arith.constant 0 : index
      %c0_12 = arith.constant 0 : index
      %25 = vector.load %arg6[%c0_10, %c0_11, %c0_12] : memref<2x4x512xf32, #tpu.memory_space<vmem>>, vector<2x4x512xf32>
      tpu.vector_store %arg6[%c0_10, %c0_11, %c0_12], %24 {strides = array<i32>} : memref<2x4x512xf32, #tpu.memory_space<vmem>>, vector<2x4x512xf32>,
    } else {
    }
    %c1_i32 = arith.constant 1 : i32
    %3 = arith.muli %arg0, %c1_i32 : i32
    %4 = arith.addi %3, %arg1 : i32
    %c4_i32 = arith.constant 4 : i32
    %5 = arith.muli %4, %c4_i32 : i32
    %c0 = arith.constant 0 : index
    %c0_1 = arith.constant 0 : index
    %6 = vector.load %arg2[%c0, %c0_1] : memref<4x512xf32, #tpu.memory_space<vmem>>, vector<4x512xf32>
    %7 = arith.negf %6 : vector<4x512xf32>
    %8 = math.exp %7 : vector<4x512xf32>
    %cst = arith.constant 1.000000e+00 : f32
    %9 = vector.broadcast %cst : f32 to vector<4x512xf32>
    %10 = arith.addf %9, %8 : vector<4x512xf32>
    %11 = arith.divf %9, %10 : vector<4x512xf32>
    %c0_2 = arith.constant 0 : index
    %c0_3 = arith.constant 0 : index
    %12 = vector.load %arg3[%c0_2, %c0_3] : memref<4x512xf32, #tpu.memory_space<vmem>>, vector<4x512xf32>
    %c4_i32_4 = arith.constant 4 : i32
    %13 = arith.addi %5, %c4_i32_4 : i32
    %c512_i32 = arith.constant 512 : i32
    %14 = arith.muli %13, %c512_i32 : i32
    %c2048_i32 = arith.constant 2048 : i32
    %15 = arith.cmpi sle, %14, %c2048_i32 : i32
    %16 = arith.extui %15 : i1 to i32
    %c0_i32_5 = arith.constant 0 : i32
    %17 = arith.cmpi ne, %16, %c0_i32_5 : i32
    scf.if %17 {
      %c0_9 = arith.constant 0 : index
      %c0_10 = arith.constant 0 : index
      %c0_11 = arith.constant 0 : index
      %24 = vector.load %arg6[%c0_9, %c0_10, %c0_11] : memref<2x4x512xf32, #tpu.memory_space<vmem>>, vector<1x4x512xf32>
      %25 = vector.shape_cast %24 : vector<1x4x512xf32> to vector<4x512xf32>
      %26 = arith.mulf %11, %12 : vector<4x512xf32>
      %27 = arith.addf %25, %26 : vector<4x512xf32>
      %c0_12 = arith.constant 0 : index
      %c0_13 = arith.constant 0 : index
      %c0_14 = arith.constant 0 : index
      %28 = vector.load %arg6[%c0_12, %c0_13, %c0_14] : memref<2x4x512xf32, #tpu.memory_space<vmem>>, vector<1x4x512xf32>
      %29 = vector.shape_cast %28 : vector<1x4x512xf32> to vector<4x512xf32>
      %30 = vector.shape_cast %27 : vector<4x512xf32> to vector<1x4x512xf32>
      tpu.vector_store %arg6[%c0_12, %c0_13, %c0_14], %30 {strides = array<i32>} : memref<2x4x512xf32, #tpu.memory_space<vmem>>, vector<1x4x512xf32>,
      %c1 = arith.constant 1 : index
      %c0_15 = arith.constant 0 : index
      %c0_16 = arith.constant 0 : index
      %31 = vector.load %arg6[%c1, %c0_15, %c0_16] : memref<2x4x512xf32, #tpu.memory_space<vmem>>, vector<1x4x512xf32>
      %32 = vector.shape_cast %31 : vector<1x4x512xf32> to vector<4x512xf32>
      %33 = arith.addf %11, %12 : vector<4x512xf32>
      %34 = arith.addf %32, %33 : vector<4x512xf32>
      %c1_17 = arith.constant 1 : index
      %c0_18 = arith.constant 0 : index
      %c0_19 = arith.constant 0 : index
      %35 = vector.load %arg6[%c1_17, %c0_18, %c0_19] : memref<2x4x512xf32, #tpu.memory_space<vmem>>, vector<1x4x512xf32>
      %36 = vector.shape_cast %35 : vector<1x4x512xf32> to vector<4x512xf32>
      %37 = vector.shape_cast %34 : vector<4x512xf32> to vector<1x4x512xf32>
      tpu.vector_store %arg6[%c1_17, %c0_18, %c0_19], %37 {strides = array<i32>} : memref<2x4x512xf32, #tpu.memory_space<vmem>>, vector<1x4x512xf32>,
    } else {
    }
    %true = arith.constant true
    %18 = arith.xori %15, %true : i1
    %19 = arith.extui %18 : i1 to i32
    %c0_i32_6 = arith.constant 0 : i32
    %20 = arith.cmpi ne, %19, %c0_i32_6 : i32
    scf.if %20 {
      %24 = tpu.iota {dimensions = array<i32: 0>} : vector<4x512xi32>
      %25 = tpu.iota {dimensions = array<i32: 1>} : vector<4x512xi32>
      %26 = vector.broadcast %5 : i32 to vector<4x512xi32>
      %27 = arith.addi %26, %24 : vector<4x512xi32>
      %c512_i32_9 = arith.constant 512 : i32
      %28 = vector.broadcast %c512_i32_9 : i32 to vector<4x512xi32>
      %29 = arith.muli %27, %28 : vector<4x512xi32>
      %30 = arith.addi %29, %25 : vector<4x512xi32>
      %c2048_i32_10 = arith.constant 2048 : i32
      %31 = vector.broadcast %c2048_i32_10 : i32 to vector<4x512xi32>
      %32 = arith.cmpi slt, %30, %31 : vector<4x512xi32>
      %c0_11 = arith.constant 0 : index
      %c0_12 = arith.constant 0 : index
      %c0_13 = arith.constant 0 : index
      %33 = vector.load %arg6[%c0_11, %c0_12, %c0_13] : memref<2x4x512xf32, #tpu.memory_space<vmem>>, vector<1x4x512xf32>
      %34 = vector.shape_cast %33 : vector<1x4x512xf32> to vector<4x512xf32>
      %35 = arith.mulf %11, %12 : vector<4x512xf32>
      %cst_14 = arith.constant 0.000000e+00 : f32
      %36 = vector.broadcast %cst_14 : f32 to vector<4x512xf32>
      %37 = arith.select %32, %35, %36 : vector<4x512xi1>, vector<4x512xf32>
      %38 = arith.addf %34, %37 : vector<4x512xf32>
      %c0_15 = arith.constant 0 : index
      %c0_16 = arith.constant 0 : index
      %c0_17 = arith.constant 0 : index
      %39 = vector.load %arg6[%c0_15, %c0_16, %c0_17] : memref<2x4x512xf32, #tpu.memory_space<vmem>>, vector<1x4x512xf32>
      %40 = vector.shape_cast %39 : vector<1x4x512xf32> to vector<4x512xf32>
      %41 = vector.shape_cast %38 : vector<4x512xf32> to vector<1x4x512xf32>
      tpu.vector_store %arg6[%c0_15, %c0_16, %c0_17], %41 {strides = array<i32>} : memref<2x4x512xf32, #tpu.memory_space<vmem>>, vector<1x4x512xf32>,
      %c1 = arith.constant 1 : index
      %c0_18 = arith.constant 0 : index
      %c0_19 = arith.constant 0 : index
      %42 = vector.load %arg6[%c1, %c0_18, %c0_19] : memref<2x4x512xf32, #tpu.memory_space<vmem>>, vector<1x4x512xf32>
      %43 = vector.shape_cast %42 : vector<1x4x512xf32> to vector<4x512xf32>
      %44 = arith.addf %11, %12 : vector<4x512xf32>
      %cst_20 = arith.constant 0.000000e+00 : f32
      %45 = vector.broadcast %cst_20 : f32 to vector<4x512xf32>
      %46 = arith.select %32, %44, %45 : vector<4x512xi1>, vector<4x512xf32>
      %47 = arith.addf %43, %46 : vector<4x512xf32>
      %c1_21 = arith.constant 1 : index
      %c0_22 = arith.constant 0 : index
      %c0_23 = arith.constant 0 : index
      %48 = vector.load %arg6[%c1_21, %c0_22, %c0_23] : memref<2x4x512xf32, #tpu.memory_space<vmem>>, vector<1x4x512xf32>
      %49 = vector.shape_cast %48 : vector<1x4x512xf32> to vector<4x512xf32>
      %50 = vector.shape_cast %47 : vector<4x512xf32> to vector<1x4x512xf32>
      tpu.vector_store %arg6[%c1_21, %c0_22, %c0_23], %50 {strides = array<i32>} : memref<2x4x512xf32, #tpu.memory_space<vmem>>, vector<1x4x512xf32>,
    } else {
    }
    %c0_i32_7 = arith.constant 0 : i32
    %21 = arith.cmpi eq, %arg1, %c0_i32_7 : i32
    %22 = arith.extui %21 : i1 to i32
    %c0_i32_8 = arith.constant 0 : i32
    %23 = arith.cmpi ne, %22, %c0_i32_8 : i32
    scf.if %23 {
      %c0_9 = arith.constant 0 : index
      %c0_10 = arith.constant 0 : index
      %c0_11 = arith.constant 0 : index
      %24 = vector.load %arg6[%c0_9, %c0_10, %c0_11] : memref<2x4x512xf32, #tpu.memory_space<vmem>>, vector<1x4x512xf32>
      %25 = vector.shape_cast %24 : vector<1x4x512xf32> to vector<4x512xf32>
      %26 = vector.shape_cast %25 : vector<4x512xf32> to vector<1x4x512xf32>
      %cst_12 = arith.constant dense<0.000000e+00> : vector<1xf32>
      %27 = vector.multi_reduction <add>, %26, %cst_12 [1, 2] : vector<1x4x512xf32> to vector<1xf32>
      %28 = vector.shape_cast %27 : vector<1xf32> to vector<1x1x1xf32>
      %29 = vector.extract %28[0, 0, 0] : f32 from vector<1x1x1xf32>
      %30 = vector.broadcast %29 : f32 to vector<1x1xf32>
      %c1 = arith.constant 1 : index
      %c0_13 = arith.constant 0 : index
      %c0_14 = arith.constant 0 : index
      %31 = vector.load %arg6[%c1, %c0_13, %c0_14] : memref<2x4x512xf32, #tpu.memory_space<vmem>>, vector<1x4x512xf32>
      %32 = vector.shape_cast %31 : vector<1x4x512xf32> to vector<4x512xf32>
      %33 = vector.shape_cast %32 : vector<4x512xf32> to vector<1x4x512xf32>
      %cst_15 = arith.constant dense<0.000000e+00> : vector<1xf32>
      %34 = vector.multi_reduction <add>, %33, %cst_15 [1, 2] : vector<1x4x512xf32> to vector<1xf32>
      %35 = vector.shape_cast %34 : vector<1xf32> to vector<1x1x1xf32>
      %36 = vector.extract %35[0, 0, 0] : f32 from vector<1x1x1xf32>
      %37 = vector.broadcast %36 : f32 to vector<1x1xf32>
      %38 = vector.shape_cast %30 : vector<1x1xf32> to vector<1x1xf32>
      %39 = vector.broadcast %38 : vector<1x1xf32> to vector<8x128xf32>
      %c0_16 = arith.constant 0 : index
      %c0_17 = arith.constant 0 : index
      %c0_18 = arith.constant 0 : index
      %40 = vector.load %arg4[%c0_16, %c0_17, %c0_18] : memref<1x8x128xf32, #tpu.memory_space<vmem>>, vector<1x8x128xf32>
      %41 = vector.shape_cast %40 : vector<1x8x128xf32> to vector<8x128xf32>
      %42 = vector.shape_cast %39 : vector<8x128xf32> to vector<1x8x128xf32>
      tpu.vector_store %arg4[%c0_16, %c0_17, %c0_18], %42 {strides = array<i32>} : memref<1x8x128xf32, #tpu.memory_space<vmem>>, vector<1x8x128xf32>,
      %43 = vector.shape_cast %37 : vector<1x1xf32> to vector<1x1xf32>
      %44 = vector.broadcast %43 : vector<1x1xf32> to vector<8x128xf32>
      %c0_19 = arith.constant 0 : index
      %c0_20 = arith.constant 0 : index
      %c0_21 = arith.constant 0 : index
      %45 = vector.load %arg5[%c0_19, %c0_20, %c0_21] : memref<1x8x128xf32, #tpu.memory_space<vmem>>, vector<1x8x128xf32>
      %46 = vector.shape_cast %45 : vector<1x8x128xf32> to vector<8x128xf32>
      %47 = vector.shape_cast %44 : vector<8x128xf32> to vector<1x8x128xf32>
      tpu.vector_store %arg5[%c0_19, %c0_20, %c0_21], %47 {strides = array<i32>} : memref<1x8x128xf32, #tpu.memory_space<vmem>>, vector<1x8x128xf32>,
    } else {
    }
    return
  }
  func.func @transform_0(%arg0: i32, %arg1: i32) -> (i32, i32) {
    %c1_i32 = arith.constant 1 : i32
    %0 = arith.muli %arg0, %c1_i32 : i32
    %1 = arith.addi %0, %arg1 : i32
    %c0_i32 = arith.constant 0 : i32
    %2 = arith.minsi %1, %c0_i32 : i32
    %c0_i32_0 = arith.constant 0 : i32
    %c0_i32_1 = arith.constant 0 : i32
    return %2, %c0_i32_0 : i32, i32
  }
  func.func @transform_1(%arg0: i32, %arg1: i32) -> (i32, i32) {
    %c1_i32 = arith.constant 1 : i32
    %0 = arith.muli %arg0, %c1_i32 : i32
    %1 = arith.addi %0, %arg1 : i32
    %c0_i32 = arith.constant 0 : i32
    %2 = arith.minsi %1, %c0_i32 : i32
    %c0_i32_0 = arith.constant 0 : i32
    %c0_i32_1 = arith.constant 0 : i32
    return %2, %c0_i32_0 : i32, i32
  }
  func.func @transform_2(%arg0: i32, %arg1: i32) -> (i32, i32, i32) {
    %c0_i32 = arith.constant 0 : i32
    %c0_i32_0 = arith.constant 0 : i32
    %c0_i32_1 = arith.constant 0 : i32
    return %arg0, %c0_i32, %c0_i32_0 : i32, i32, i32
  }
  func.func @transform_3(%arg0: i32, %arg1: i32) -> (i32, i32, i32) {
    %c0_i32 = arith.constant 0 : i32
    %c0_i32_0 = arith.constant 0 : i32
    %c0_i32_1 = arith.constant 0 : i32
    return %arg0, %c0_i32, %c0_i32_0 : i32, i32, i32
  }
}

</mosaic_0001>

<llo_original>
// kernel: tpu_custom_call.1
$region0: #{tpu_custom_call.1}
  #allocation0 [shape = 'u32[]', space=smem, size = 0x4, offset = 0x4, fixed_abs, tag = 'smem constant byte address 0x4 - core index']
  #allocation1 [shape = 'u32[144,128]{1,0:T(1,128)}', space=vmem, size = 0x12000, scoped, tag = 'internal scratch']
  #allocation2 [shape = 'f32[2,4,512]{2,1,0:T(4,128)}', space=vmem, size = 0x4000, scoped, tag = 'scratch operand']
  %s0 = inlined_call_operand.hbm [shape: f32[4,512], index: 0, kind: input, shape index: {}]
  %s1 = inlined_call_operand.hbm [shape: f32[4,512], index: 1, kind: input, shape index: {}]
  %s2 = inlined_call_operand.hbm [shape: f32[1,8,128], index: 2, kind: output, shape index: {0}]
  %s3 = inlined_call_operand.hbm [shape: f32[1,8,128], index: 3, kind: output, shape index: {1}]
  %4 = xla_tuple %s2, %s3
  %s5 = sld [smem:[#allocation0]]
  $region50: #{tpu_custom_call.1} parent=0
    _
  %s7 = ssub.s32 1, %s5
  %s8 = scalar_select 0, %s7, %s5
  $region1: #{tpu_custom_call.1} parent=0
    #allocation3 [shape = 'u8[8192]{0}', space=vmem, size = 0x2000, scoped, tag = 'input window, operand 0, single buffered']
    #allocation4 [shape = 's32[1]{0}', space=sflag, size = 0x4, scoped, tag = 'scoped memory for tpu_custom_call.1']
    #allocation5 [shape = 's32[1]{0}', space=sflag, size = 0x4, scoped, tag = 'scoped memory for tpu_custom_call.1']
    #allocation6 [shape = 'u8[8192]{0}', space=vmem, size = 0x2000, scoped, tag = 'input window, operand 1, single buffered']
    #allocation7 [shape = 's32[1]{0}', space=sflag, size = 0x4, scoped, tag = 'scoped memory for tpu_custom_call.1']
    #allocation8 [shape = 'u8[4096]{0}', space=vmem, size = 0x1000, scoped, tag = 'output window, operand 0, single buffered']
    #allocation9 [shape = 'u8[4096]{0}', space=vmem, size = 0x1000, scoped, tag = 'output window, operand 1, single buffered']
    #allocation10 [shape = 's32[1]{0}', space=sflag, size = 0x4, scoped, tag = 'scoped memory for tpu_custom_call.1']
    %9 = vsyncpa [#allocation4], 0
    %10 = vsyncpa [#allocation7], 0
    %11 = vsyncpa [#allocation5], 0
    %12 = vsyncpa [#allocation10], 0
    // Predicated region
    $region2: #{tpu_custom_call.1} parent=1 // pred_check
      _
    $region3: #{tpu_custom_call.1} parent=1 // pred_check_branch
      %14 = sbr.rel (0) target = $region5
    $region4: #{tpu_custom_call.1} parent=1 // pred_region
      %s15 = sadd.s32 0, 0
      %p16 = scmp.lt.s32.totalorder %s15, 0
      %s17 = scalar_select %p16, %s15, 0
      %s19 = ssub.s32 256, 256
      %20 = vsyncadd [#allocation4], %s19
      %s21 = smul.addr %s17, 4
      %s22 = smul.addr %s21, 64
      %s23 = scalar_lea.hbm %s0, %s22
      %s25 = sshll.u32 [#allocation3], 4
      %s26 = int_to_ptr.vmem [resolvable:$true] %s25
      %28 = dma.hbm_to_vmem [thread:$0]  %s23, 256, %s26, [#allocation4]
    $region5: #{tpu_custom_call.1} parent=1 // pred_fallthru
      _
    // Predicated region
    $region6: #{tpu_custom_call.1} parent=1 // pred_check
      _
    $region7: #{tpu_custom_call.1} parent=1 // pred_check_branch
      %30 = sbr.rel (0) target = $region9
    $region8: #{tpu_custom_call.1} parent=1 // pred_region
      %s31 = sadd.s32 0, 0
      %p32 = scmp.lt.s32.totalorder %s31, 0
      %s33 = scalar_select %p32, %s31, 0
      %s35 = ssub.s32 256, 256
      %36 = vsyncadd [#allocation7], %s35
      %s37 = smul.addr %s33, 4
      %s38 = smul.addr %s37, 64
      %s39 = scalar_lea.hbm %s1, %s38
      %s41 = sshll.u32 [#allocation6], 4
      %s42 = int_to_ptr.vmem [resolvable:$true] %s41
      %44 = dma.hbm_to_vmem [thread:$0]  %s39, 256, %s42, [#allocation7]
    $region9: #{tpu_custom_call.1} parent=1 // pred_fallthru
      _
    // Predicated region
    $region10: #{tpu_custom_call.1} parent=1 // pred_check
      _
    $region11: #{tpu_custom_call.1} parent=1 // pred_check_branch
      %46 = sbr.rel (0) target = $region13
    $region12: #{tpu_custom_call.1} parent=1 // pred_region
      %47 = dma.done [#allocation4], 256
    $region13: #{tpu_custom_call.1} parent=1 // pred_fallthru
      _
    // Predicated region
    $region14: #{tpu_custom_call.1} parent=1 // pred_check
      _
    $region15: #{tpu_custom_call.1} parent=1 // pred_check_branch
      %49 = sbr.rel (0) target = $region17
    $region16: #{tpu_custom_call.1} parent=1 // pred_region
      %50 = dma.done [#allocation7], 256
    $region17: #{tpu_custom_call.1} parent=1 // pred_fallthru
      _
    %s51 = sadd.s32 0, 0
    %p52 = scmp.lt.s32.totalorder %s51, 0
    %s53 = scalar_select %p52, %s51, 0
    %s54 = sadd.s32 0, 0
    %p55 = scmp.lt.s32.totalorder %s54, 0
    %s56 = scalar_select %p55, %s54, 0
    %p57 = scmp.eq.s32.totalorder 0, 0
    // Predicated region
    $region18: #{tpu_custom_call.1} parent=1 // pred_check
      %p58 = pneg %p57
    $region19: #{tpu_custom_call.1} parent=1 // pred_check_branch
      %60 = sbr.rel (%p58) target = $region21
    $region20: #{tpu_custom_call.1} parent=1 // pred_region
      %61 = vst [vmem:[#allocation2] sm:$0xff] 0.0
      %62 = vst [vmem:[#allocation2 + $0x8] sm:$0xff] 0.0
      %63 = vst [vmem:[#allocation2 + $0x10] sm:$0xff] 0.0
      %64 = vst [vmem:[#allocation2 + $0x18] sm:$0xff] 0.0
    $region21: #{tpu_custom_call.1} parent=1 // pred_fallthru
      _
    %s65 = sadd.s32 0, 0
    %s66 = smul.u32 %s65, 4
    %v67 = vld [vmem:[#allocation3] sm:$0xff]
    %v68 = vld [vmem:[#allocation3 + $0x8] sm:$0xff]
    %v69 = vxor.u32 %v67, 2147483648
    %v70 = vxor.u32 %v68, 2147483648
    %v71 = vmul.f32 %v69, 1.442695
    %v72 = vpow.pop %v71
    %v73 = vmul.f32 %v70, 1.442695
    %v74 = vpow.pop %v73
    %v75 = vadd.f32 %v72, 1.0
    %v76 = vadd.f32 %v74, 1.0
    %v77 = vrcp.pop %v75
    %v78 = vmul.f32 1.0, %v77
    %v79 = vrcp.pop %v76
    %v80 = vmul.f32 1.0, %v79
    %v81 = vld [vmem:[#allocation6] sm:$0xff]
    %v82 = vld [vmem:[#allocation6 + $0x8] sm:$0xff]
    %s83 = sadd.s32 %s66, 4
    %s84 = smul.u32 %s83, 512
    %p85 = scmp.le.s32.totalorder %s84, 2048
    // Predicated region
    $region22: #{tpu_custom_call.1} parent=1 // pred_check
      %p86 = pneg %p85
    $region23: #{tpu_custom_call.1} parent=1 // pred_check_branch
      %88 = sbr.rel (%p86) target = $region25
    $region24: #{tpu_custom_call.1} parent=1 // pred_region
      %v89 = vld [vmem:[#allocation2] sm:$0xff]
      %v90 = vld [vmem:[#allocation2 + $0x8] sm:$0xff]
      %v91 = vmul.f32 %v78, %v81
      %v92 = vmul.f32 %v80, %v82
      %v93 = vadd.f32 %v89, %v91
      %v94 = vadd.f32 %v90, %v92
      %95 = vst [vmem:[#allocation2] sm:$0xff] %v93
      %96 = vst [vmem:[#allocation2 + $0x8] sm:$0xff] %v94
      %s97 = scalar_lea.vmem [#allocation2], 16
      %v98 = vld [vmem:[%s97] sm:$0xff]
      %v99 = vld [vmem:[%s97 + $0x8] sm:$0xff]
      %v100 = vadd.f32 %v78, %v81
      %v101 = vadd.f32 %v80, %v82
      %v102 = vadd.f32 %v98, %v100
      %v103 = vadd.f32 %v99, %v101
      %104 = vst [vmem:[%s97] sm:$0xff] %v102
      %105 = vst [vmem:[%s97 + $0x8] sm:$0xff] %v103
    $region25: #{tpu_custom_call.1} parent=1 // pred_fallthru
      _
    %p106 = scmp.gt.s32.totalorder %s84, 2048
    // Predicated region
    $region26: #{tpu_custom_call.1} parent=1 // pred_check
      %p107 = pneg %p106
    $region27: #{tpu_custom_call.1} parent=1 // pred_check_branch
      %109 = sbr.rel (%p107) target = $region29
    $region28: #{tpu_custom_call.1} parent=1 // pred_region
      %v110 = vlaneseq
      %v111 = vshrl.u32 %v110, 7
      %v112 = vlaneseq
      %v113 = vand.u32 %v112, 127
      %v114 = vadd.s32 %v113, 128
      %v115 = vadd.s32 %v113, 256
      %v116 = vadd.s32 %v113, 384
      %v117 = vstv %s66
      %v118 = vadd.s32 %v117, %v111
      %v119 = vmul.u32 %v118, 512
      %v120 = vadd.s32 %v119, %v113
      %v121 = vadd.s32 %v119, %v114
      %v122 = vadd.s32 %v119, %v115
      %v123 = vadd.s32 %v119, %v116
      %vm124 = vcmp.lt.s32.totalorder %v120, 2048
      %vm125 = vcmp.lt.s32.totalorder %v121, 2048
      %vm126 = vcmp.lt.s32.totalorder %v122, 2048
      %vm127 = vcmp.lt.s32.totalorder %v123, 2048
      %v128 = vld [vmem:[#allocation2] sm:$0xff]
      %v129 = vld [vmem:[#allocation2 + $0x8] sm:$0xff]
      %v130 = vmul.f32 %v78, %v81
      %v131 = vmul.f32 %v80, %v82
      %v134 = vcombine.high %v130, %v130
      %v135 = vcombine.high %v131, %v131
      %v138 = vsel %vm124, %v130, 0.0
      %v139 = vsel %vm125, %v134, 0.0
      %v140 = vsel %vm126, %v131, 0.0
      %v141 = vsel %vm127, %v135, 0.0
      %v146 = vcombine.low %v138, %v139
      %v147 = vcombine.low %v140, %v141
      %v150 = vadd.f32 %v128, %v146
      %v151 = vadd.f32 %v129, %v147
      %152 = vst [vmem:[#allocation2] sm:$0xff] %v150
      %153 = vst [vmem:[#allocation2 + $0x8] sm:$0xff] %v151
      %s154 = scalar_lea.vmem [#allocation2], 16
      %v155 = vld [vmem:[%s154] sm:$0xff]
      %v156 = vld [vmem:[%s154 + $0x8] sm:$0xff]
      %v157 = vadd.f32 %v78, %v81
      %v158 = vadd.f32 %v80, %v82
      %v161 = vcombine.high %v157, %v157
      %v162 = vcombine.high %v158, %v158
      %v165 = vsel %vm124, %v157, 0.0
      %v166 = vsel %vm125, %v161, 0.0
      %v167 = vsel %vm126, %v158, 0.0
      %v168 = vsel %vm127, %v162, 0.0
      %v173 = vcombine.low %v165, %v166
      %v174 = vcombine.low %v167, %v168
      %v177 = vadd.f32 %v155, %v173
      %v178 = vadd.f32 %v156, %v174
      %179 = vst [vmem:[%s154] sm:$0xff] %v177
      %180 = vst [vmem:[%s154 + $0x8] sm:$0xff] %v178
    $region29: #{tpu_custom_call.1} parent=1 // pred_fallthru
      _
    // Predicated region
    $region30: #{tpu_custom_call.1} parent=1 // pred_check
      %p181 = pneg %p57
    $region31: #{tpu_custom_call.1} parent=1 // pred_check_branch
      %183 = sbr.rel (%p181) target = $region33
    $region32: #{tpu_custom_call.1} parent=1 // pred_region
      %v184 = vld [vmem:[#allocation2] sm:$0xff]
      %v185 = vld [vmem:[#allocation2 + $0x8] sm:$0xff]
      %v188 = vcombine.high %v184, %v184
      %v189 = vcombine.high %v185, %v185
      %vm192 = vcmask 1043456
      %v193 = vsel %vm192, %v184, 0.0
      %v194 = vsel %vm192, %v188, 0.0
      %v195 = vadd.f32 %v193, %v194
      %v196 = vsel %vm192, %v185, 0.0
      %v197 = vadd.f32 %v195, %v196
      %v198 = vsel %vm192, %v189, 0.0
      %v199 = vadd.f32 %v197, %v198
      %200 = vadd.xlane.f32.xlu0 %v199
      %v201 = vpop.xlane.xlu0 %200
      %v202 = vrot.slane %v201, 4
      %v203 = vadd.f32 %v201, %v202
      %v204 = vrot.slane %v203, 2
      %v205 = vadd.f32 %v203, %v204
      %v206 = vrot.slane %v205, 1
      %v207 = vadd.f32 %v205, %v206
      %s208 = vtos %v207
      %s209 = scalar_lea.vmem [#allocation2], 16
      %v210 = vld [vmem:[%s209] sm:$0xff]
      %v211 = vld [vmem:[%s209 + $0x8] sm:$0xff]
      %v214 = vcombine.high %v210, %v210
      %v215 = vcombine.high %v211, %v211
      %v218 = vsel %vm192, %v210, 0.0
      %v219 = vsel %vm192, %v214, 0.0
      %v220 = vadd.f32 %v218, %v219
      %v221 = vsel %vm192, %v211, 0.0
      %v222 = vadd.f32 %v220, %v221
      %v223 = vsel %vm192, %v215, 0.0
      %v224 = vadd.f32 %v222, %v223
      %225 = vadd.xlane.f32.xlu0 %v224
      %v226 = vpop.xlane.xlu0 %225
      %v227 = vrot.slane %v226, 4
      %v228 = vadd.f32 %v226, %v227
      %v229 = vrot.slane %v228, 2
      %v230 = vadd.f32 %v228, %v229
      %v231 = vrot.slane %v230, 1
      %v232 = vadd.f32 %v230, %v231
      %s233 = vtos %v232
      %v234 = vstv %s208
      %235 = vst [vmem:[#allocation8] sm:$0xff] %v234
      %v236 = vstv %s233
      %237 = vst [vmem:[#allocation9] sm:$0xff] %v236
    $region33: #{tpu_custom_call.1} parent=1 // pred_fallthru
      _
    // Predicated region
    $region34: #{tpu_custom_call.1} parent=1 // pred_check
      _
    $region35: #{tpu_custom_call.1} parent=1 // pred_check_branch
      %239 = sbr.rel (0) target = $region37
    $region36: #{tpu_custom_call.1} parent=1 // pred_region
      %s241 = ssub.s32 128, 128
      %242 = vsyncadd [#allocation5], %s241
      %s244 = sshll.u32 [#allocation8], 4
      %s245 = int_to_ptr.vmem [resolvable:$true] %s244
      %247 = dma.vmem_to_hbm [thread:$0]  %s245, 128, %s2, [#allocation5]
    $region37: #{tpu_custom_call.1} parent=1 // pred_fallthru
      _
    // Predicated region
    $region38: #{tpu_custom_call.1} parent=1 // pred_check
      _
    $region39: #{tpu_custom_call.1} parent=1 // pred_check_branch
      %249 = sbr.rel (0) target = $region41
    $region40: #{tpu_custom_call.1} parent=1 // pred_region
      %s251 = ssub.s32 128, 128
      %252 = vsyncadd [#allocation10], %s251
      %s254 = sshll.u32 [#allocation9], 4
      %s255 = int_to_ptr.vmem [resolvable:$true] %s254
      %257 = dma.vmem_to_hbm [thread:$0]  %s255, 128, %s3, [#allocation10]
    $region41: #{tpu_custom_call.1} parent=1 // pred_fallthru
      _
    // Predicated region
    $region42: #{tpu_custom_call.1} parent=1 // pred_check
      _
    $region43: #{tpu_custom_call.1} parent=1 // pred_check_branch
      %259 = sbr.rel (0) target = $region45
    $region44: #{tpu_custom_call.1} parent=1 // pred_region
      %260 = dma.done [#allocation5], 128
    $region45: #{tpu_custom_call.1} parent=1 // pred_fallthru
      _
    // Predicated region
    $region46: #{tpu_custom_call.1} parent=1 // pred_check
      _
    $region47: #{tpu_custom_call.1} parent=1 // pred_check_branch
      %262 = sbr.rel (0) target = $region49
    $region48: #{tpu_custom_call.1} parent=1 // pred_region
      %263 = dma.done [#allocation10], 128
    $region49: #{tpu_custom_call.1} parent=1 // pred_fallthru
      _
    %264 = vsyncpa [#allocation4], 1
    %265 = vsyncpa [#allocation7], 1
    %266 = vsyncpa [#allocation5], 1
    %267 = vsyncpa [#allocation10], 1

</llo_original>
